<compile_context>
chip_gen: v7x
topology: tpu7x:2x2x1
jax: 0.10.0
libtpu: 0.0.40
codegen_flags: <defaults>
</compile_context>

<pallas_src>
import jax
import jax.numpy as jnp
from jax.experimental import pallas as pl
from jax.experimental.pallas import tpu as pltpu

BN_EPS = 1e-5          # PyTorch BatchNorm1d default eps
LEAKY_SLOPE = 0.01     # F.leaky_relu default negative_slope
_LANE = 128
_SUBLANE = 8
_HEADROOM = 2 * 1024 * 1024   # Mosaic internal scratch / spill slack


def _round_up(n, m):
    return ((n + m - 1) // m) * m


def _sublane(dtype):
    # Native sublane tile: 8 for 32-bit, 16 for 16-bit, 32 for 8-bit dtypes.
    return 8 * max(1, 4 // jnp.dtype(dtype).itemsize)


def _buf_bytes(shape, dtype):
    """VMEM bytes of one buffer of `shape`, incl. (sublane, lane) padding."""
    itemsize = jnp.dtype(dtype).itemsize
    shape = tuple(int(d) for d in shape)
    if len(shape) == 1:
        shape = (1,) + shape
    *lead, s2, s1 = shape
    n = _round_up(max(s2, 1), _sublane(dtype)) * _round_up(max(s1, 1), _LANE)
    for d in lead:
        n *= d
    return n * itemsize


def _vmem_budget_bytes():
    # ~75% of per-core VMEM (64 MiB on v7x, 128 MiB on v5e/v6e), leaving
    # headroom for Mosaic internal scratch.
    try:
        cap = int(pltpu.get_tpu_info().vmem_capacity_bytes)
    except Exception:
        cap = 64 * 1024 * 1024            # conservative default (v7x)
    return max(16 * 1024 * 1024, (cap * 3) // 4)


# ----------------------------------------------------------------------------
# Kernel: in-kernel spatial sum-pool + two BN-folded Linear layers.
# ----------------------------------------------------------------------------
def basecnn_kernel(x_ref, w1_ref, b1_ref, w2_ref, b2_ref, out_ref):
    # x_ref: (TB, C, HW) -- native backbone layout, HW rides the lane axis.
    # Sum-pool over spatial positions with f32 accumulation (no f32 tile copy).
    pooled = jnp.sum(x_ref[...], axis=-1, dtype=jnp.float32)          # (TB, C)

    # lin_1: Linear (eval-mode BatchNorm folded into w1/b1) + leaky_relu.
    h = jnp.dot(pooled, w1_ref[...], preferred_element_type=jnp.float32) + b1_ref[...]
    h = jnp.where(h >= 0.0, h, LEAKY_SLOPE * h)

    # lin_2: Linear (BatchNorm folded), no activation.
    h = jnp.dot(h, w2_ref[...], preferred_element_type=jnp.float32) + b2_ref[...]
    out_ref[...] = h.astype(out_ref.dtype)                            # (TB, NC_PAD)


# ----------------------------------------------------------------------------
# Wrapper
# ----------------------------------------------------------------------------
def _fold_bn(w, b, gamma, beta, mean, var):
    """Fold eval-mode BatchNorm1d into a (in, out) Linear: y = x@W' + b'."""
    scale = gamma * jax.lax.rsqrt(var + BN_EPS)            # (1, out)
    w_f = (w * scale).astype(jnp.float32)                  # (in, out)
    b_f = ((b - mean) * scale + beta).astype(jnp.float32)  # (1, out)
    return w_f, b_f


def basecnn_forward(x, params, *, batch_tile=None):
    """BaseCNN head. x: (B, C, H, W) backbone feature map (f32 or bf16)."""
    B, C, H, W = x.shape
    HW = H * W
    in_ch, hdim = params["w1"].shape
    num_class = params["w2"].shape[1]
    assert in_ch == C

    # Free layout change only: (B, C, H, W) -> (B, C, HW). No transpose, no pad.
    x3 = x.reshape(B, C, HW)
    itemsize = x3.dtype.itemsize

    # Fold eval-mode BatchNorm into the linear weights (numerically identical).
    w1f, b1f = _fold_bn(params["w1"], params["b1"], params["g1"],
                        params["be1"], params["m1"], params["v1"])
    w2f, b2f = _fold_bn(params["w2"], params["b2"], params["g2"],
                        params["be2"], params["m2"], params["v2"])

    # Pad hidden / class dims to lane-dense multiples of 128 (zeros are exact).
    hdim_p = _round_up(hdim, _LANE)
    nc_p = _round_up(num_class, _LANE)
    w1f = jnp.pad(w1f, ((0, 0), (0, hdim_p - hdim)))
    b1f = jnp.pad(b1f, ((0, 0), (0, hdim_p - hdim)))
    w2f = jnp.pad(w2f, ((0, hdim_p - hdim), (0, nc_p - num_class)))
    b2f = jnp.pad(b2f, ((0, 0), (0, nc_p - num_class)))

    budget = _vmem_budget_bytes()
    weight_bytes = (_buf_bytes((C, hdim_p), jnp.float32)
                    + _buf_bytes((1, hdim_p), jnp.float32)
                    + _buf_bytes((hdim_p, nc_p), jnp.float32)
                    + _buf_bytes((1, nc_p), jnp.float32))

    def plan_tile(n_weight_bufs):
        """Pick the batch tile and an honest vmem limit for this buffering."""
        if B <= _SUBLANE:
            tb = B                                      # single exact tile
        elif batch_tile is not None:
            tb = min(_round_up(int(batch_tile), _SUBLANE), _round_up(B, _SUBLANE))
        else:
            fixed = n_weight_bufs * weight_bytes + _HEADROOM
            in_row = (_round_up(C, _sublane(x3.dtype))
                      * _round_up(HW, _LANE) * itemsize)
            per_row = (2 * in_row                       # double-buffered input
                       + 2 * nc_p * 4                   # double-buffered output
                       + _round_up(C, _LANE) * 4        # pooled f32 live value
                       + hdim_p * 4)                    # hidden f32 live value
            tb = (budget - fixed) // max(per_row, 1)
            tb = max(_SUBLANE, (tb // _SUBLANE) * _SUBLANE)
            # Keep >= 2 grid steps so v7x's two TensorCores both get work.
            tb = min(tb, _round_up(pl.cdiv(B, 2), _SUBLANE), _round_up(B, _SUBLANE))
        est = (2 * _buf_bytes((tb, C, HW), x3.dtype)
               + n_weight_bufs * weight_bytes
               + 2 * _buf_bytes((tb, nc_p), jnp.float32)
               + _buf_bytes((tb, _round_up(C, _LANE)), jnp.float32)
               + _buf_bytes((tb, hdim_p), jnp.float32)
               + _HEADROOM)
        vmem_limit = int(min(budget, max(16 * 1024 * 1024, est)))
        return tb, vmem_limit

    # Advisory cost: tell XLA this is a large memory-bound op so surrounding
    # HLOs (the backbone) get scheduled to overlap it.
    cost = pl.CostEstimate(
        flops=int(2 * B * C * hdim_p + 2 * B * hdim_p * nc_p + B * C * HW),
        transcendentals=0,
        bytes_accessed=int(B * C * HW * itemsize
                           + 4 * (w1f.size + b1f.size + w2f.size + b2f.size)
                           + B * nc_p * 4),
    )

    def build_and_run(single_buffer_weights):
        n_weight_bufs = 1 if single_buffer_weights else 2
        tb, vmem_limit = plan_tile(n_weight_bufs)
        grid = (pl.cdiv(B, tb),)

        def const_spec(shape):
            if single_buffer_weights:
                return pl.BlockSpec(shape, lambda b: (0,) * len(shape),
                                    pipeline_mode=pl.Buffered(1))
            return pl.BlockSpec(shape, lambda b: (0,) * len(shape))

        call = pl.pallas_call(
            basecnn_kernel,
            out_shape=jax.ShapeDtypeStruct((B, nc_p), jnp.float32),
            grid_spec=pltpu.PrefetchScalarGridSpec(
                num_scalar_prefetch=0,
                grid=grid,
                in_specs=[
                    pl.BlockSpec((tb, C, HW), lambda b: (b, 0, 0)),  # streamed
                    const_spec((C, hdim_p)),                         # resident
                    const_spec((1, hdim_p)),
                    const_spec((hdim_p, nc_p)),
                    const_spec((1, nc_p)),
                ],
                out_specs=pl.BlockSpec((tb, nc_p), lambda b: (b, 0)),
            ),
            compiler_params=pltpu.CompilerParams(
                dimension_semantics=("parallel",),   # v7x: 2 TCs split the batch
                vmem_limit_bytes=vmem_limit,
            ),
            cost_estimate=cost,
        )
        return call(x3, w1f, b1f, w2f, b2f)

    try:
        out = jax.block_until_ready(build_and_run(True))
    except Exception:
        # Fallback if this jax build rejects pl.Buffered(1) single-buffering.
        out = build_and_run(False)

    return out[:, :num_class]


# ----------------------------------------------------------------------------
# Synthetic params + plain-JAX reference (unfolded BN) for sanity checking.
# ----------------------------------------------------------------------------
def init_params(key, in_ch, hdim, num_class):
    ks = jax.random.split(key, 10)

    def row(k, n, scale=1.0, offset=0.0):
        return jax.random.normal(k, (1, n), jnp.float32) * scale + offset

    return {
        # lin_1: nn.Linear(in_ch, hdim) stored as (in, out) = W.T
        "w1": jax.random.normal(ks[0], (in_ch, hdim), jnp.float32) * 0.05,
        "b1": row(ks[1], hdim, 0.05),
        # BatchNorm1d(hdim), eval-mode stats
        "g1": row(ks[2], hdim, 0.1, 1.0),
        "be1": row(ks[3], hdim, 0.1),
        "m1": row(ks[4], hdim, 0.1),
        "v1": jnp.abs(row(ks[5], hdim, 0.1, 1.0)) + 0.1,
        # lin_2: nn.Linear(hdim, num_class) stored as (in, out)
        "w2": jax.random.normal(ks[6], (hdim, num_class), jnp.float32) * 0.05,
        "b2": row(ks[7], num_class, 0.05),
        # BatchNorm1d(num_class), eval-mode stats
        "g2": row(ks[8], num_class, 0.1, 1.0),
        "be2": row(ks[9], num_class, 0.1),
        "m2": jnp.zeros((1, num_class), jnp.float32),
        "v2": jnp.ones((1, num_class), jnp.float32),
    }


def reference_forward(x, params):
    h = jnp.sum(x.astype(jnp.float32), axis=(-1, -2))
    h = h @ params["w1"] + params["b1"]
    h = (h - params["m1"]) * jax.lax.rsqrt(params["v1"] + BN_EPS) * params["g1"] + params["be1"]
    h = jnp.where(h >= 0.0, h, LEAKY_SLOPE * h)
    h = h @ params["w2"] + params["b2"]
    h = (h - params["m2"]) * jax.lax.rsqrt(params["v2"] + BN_EPS) * params["g2"] + params["be2"]
    return h


if __name__ == "__main__":
    B, C, H, W = 2, 8, 16, 16
    HDIM, NUM_CLASS = 32, 1

    key = jax.random.PRNGKey(0)
    k_x, k_p, k_x2 = jax.random.split(key, 3)
    x = jax.random.normal(k_x, (B, C, H, W), jnp.float32)
    params = init_params(k_p, C, HDIM, NUM_CLASS)

    # f32 path, B <= 8 -> single exact tile (no padding / transpose anywhere).
    out = jax.block_until_ready(basecnn_forward(x, params))
    ref = reference_forward(x, params)
    assert out.shape == (B, NUM_CLASS), out.shape
    assert jnp.allclose(out, ref, atol=1e-3, rtol=1e-3), (out, ref)

    # Multi-tile grid with a ragged last tile (B=20, tb=8 -> grid=(3,)).
    x2 = jax.random.normal(k_x2, (20, C, H, W), jnp.float32)
    out2 = jax.block_until_ready(basecnn_forward(x2, params, batch_tile=8))
    ref2 = reference_forward(x2, params)
    assert out2.shape == (20, NUM_CLASS), out2.shape
    assert jnp.allclose(out2, ref2, atol=1e-3, rtol=1e-3), (out2, ref2)

    # Auto VMEM-budgeted tile sizing (>= 2 grid steps when B > 8).
    out3 = jax.block_until_ready(basecnn_forward(x2, params))
    assert jnp.allclose(out3, ref2, atol=1e-3, rtol=1e-3), (out3, ref2)

    # bf16 feature-map transport (half HBM traffic), f32 accumulation in-kernel.
    out_bf = jax.block_until_ready(basecnn_forward(x.astype(jnp.bfloat16), params))
    ref_bf = reference_forward(x.astype(jnp.bfloat16).astype(jnp.float32), params)
    assert jnp.allclose(out_bf, ref_bf, atol=1e-3, rtol=1e-3), (out_bf, ref_bf)

    print("KERNEL_OK")
</pallas_src>

<mosaic_0001>
module attributes {stable_mosaic.version = 11 : i64} {
  func.func @basecnn_kernel(%arg0: i32, %arg1: memref<2x8x256xf32, #tpu.memory_space<vmem>>, %arg2: memref<8x128xf32, #tpu.memory_space<vmem>>, %arg3: memref<1x128xf32, #tpu.memory_space<vmem>>, %arg4: memref<128x128xf32, #tpu.memory_space<vmem>>, %arg5: memref<1x128xf32, #tpu.memory_space<vmem>>, %arg6: memref<2x128xf32, #tpu.memory_space<vmem>>) attributes {dimension_semantics = [#tpu.dimension_semantics<parallel>], iteration_bounds = array<i64: 1>, scalar_prefetch = 0 : i64, scratch_operands = 0 : i64, tpu.core_type = #tpu.core_type<tc>, window_params = [{transform_indices = @transform_0, window_bounds = array<i64: 2, 8, 256>}, {pipeline_mode = #tpu.pipeline_mode<synchronous>, transform_indices = @transform_1, window_bounds = array<i64: 8, 128>}, {pipeline_mode = #tpu.pipeline_mode<synchronous>, transform_indices = @transform_2, window_bounds = array<i64: 1, 128>}, {pipeline_mode = #tpu.pipeline_mode<synchronous>, transform_indices = @transform_3, window_bounds = array<i64: 128, 128>}, {pipeline_mode = #tpu.pipeline_mode<synchronous>, transform_indices = @transform_4, window_bounds = array<i64: 1, 128>}, {transform_indices = @transform_5, window_bounds = array<i64: 2, 128>}]} {
    %c0 = arith.constant 0 : index
    %c0_0 = arith.constant 0 : index
    %c0_1 = arith.constant 0 : index
    %0 = vector.load %arg1[%c0, %c0_0, %c0_1] : memref<2x8x256xf32, #tpu.memory_space<vmem>>, vector<2x8x256xf32>
    %cst = arith.constant dense<0.000000e+00> : vector<2x8xf32>
    %1 = vector.multi_reduction <add>, %0, %cst [2] : vector<2x8x256xf32> to vector<2x8xf32>
    %c0_2 = arith.constant 0 : index
    %c0_3 = arith.constant 0 : index
    %2 = vector.load %arg2[%c0_2, %c0_3] : memref<8x128xf32, #tpu.memory_space<vmem>>, vector<8x128xf32>
    %cst_4 = arith.constant dense<0.000000e+00> : vector<2x128xf32>
    %3 = tpu.matmul %1, %2, %cst_4 {dimension_numbers = #tpu.dot_dimension_numbers<[1], [0], [0], [1], [0, 0, 1, 1], [], []>} : vector<2x8xf32>, vector<8x128xf32>, vector<2x128xf32> -> vector<2x128xf32>
    %c0_5 = arith.constant 0 : index
    %c0_6 = arith.constant 0 : index
    %4 = vector.load %arg3[%c0_5, %c0_6] : memref<1x128xf32, #tpu.memory_space<vmem>>, vector<1x128xf32>
    %5 = vector.broadcast %4 : vector<1x128xf32> to vector<2x128xf32>
    %6 = arith.addf %3, %5 : vector<2x128xf32>
    %cst_7 = arith.constant 0.000000e+00 : f32
    %7 = vector.broadcast %cst_7 : f32 to vector<2x128xf32>
    %8 = arith.cmpf oge, %6, %7 : vector<2x128xf32>
    %cst_8 = arith.constant 0.00999999977 : f32
    %9 = vector.broadcast %cst_8 : f32 to vector<2x128xf32>
    %10 = arith.mulf %9, %6 : vector<2x128xf32>
    %11 = arith.select %8, %6, %10 : vector<2x128xi1>, vector<2x128xf32>
    %c0_9 = arith.constant 0 : index
    %c0_10 = arith.constant 0 : index
    %12 = vector.load %arg4[%c0_9, %c0_10] : memref<128x128xf32, #tpu.memory_space<vmem>>, vector<128x128xf32>
    %cst_11 = arith.constant dense<0.000000e+00> : vector<2x128xf32>
    %13 = tpu.matmul %11, %12, %cst_11 {dimension_numbers = #tpu.dot_dimension_numbers<[1], [0], [0], [1], [0, 0, 1, 1], [], []>} : vector<2x128xf32>, vector<128x128xf32>, vector<2x128xf32> -> vector<2x128xf32>
    %c0_12 = arith.constant 0 : index
    %c0_13 = arith.constant 0 : index
    %14 = vector.load %arg5[%c0_12, %c0_13] : memref<1x128xf32, #tpu.memory_space<vmem>>, vector<1x128xf32>
    %15 = vector.broadcast %14 : vector<1x128xf32> to vector<2x128xf32>
    %16 = arith.addf %13, %15 : vector<2x128xf32>
    %c0_14 = arith.constant 0 : index
    %c0_15 = arith.constant 0 : index
    %17 = vector.load %arg6[%c0_14, %c0_15] : memref<2x128xf32, #tpu.memory_space<vmem>>, vector<2x128xf32>
    tpu.vector_store %arg6[%c0_14, %c0_15], %16 {strides = array<i32>} : memref<2x128xf32, #tpu.memory_space<vmem>>, vector<2x128xf32>,
    return
  }
  func.func @transform_0(%arg0: i32) -> (i32, i32, i32) {
    %c0_i32 = arith.constant 0 : i32
    %c0_i32_0 = arith.constant 0 : i32
    %c0_i32_1 = arith.constant 0 : i32
    return %arg0, %c0_i32, %c0_i32_0 : i32, i32, i32
  }
  func.func @transform_1(%arg0: i32) -> (i32, i32) {
    %c0_i32 = arith.constant 0 : i32
    %c0_i32_0 = arith.constant 0 : i32
    %c0_i32_1 = arith.constant 0 : i32
    return %c0_i32, %c0_i32_0 : i32, i32
  }
  func.func @transform_2(%arg0: i32) -> (i32, i32) {
    %c0_i32 = arith.constant 0 : i32
    %c0_i32_0 = arith.constant 0 : i32
    %c0_i32_1 = arith.constant 0 : i32
    return %c0_i32, %c0_i32_0 : i32, i32
  }
  func.func @transform_3(%arg0: i32) -> (i32, i32) {
    %c0_i32 = arith.constant 0 : i32
    %c0_i32_0 = arith.constant 0 : i32
    %c0_i32_1 = arith.constant 0 : i32
    return %c0_i32, %c0_i32_0 : i32, i32
  }
  func.func @transform_4(%arg0: i32) -> (i32, i32) {
    %c0_i32 = arith.constant 0 : i32
    %c0_i32_0 = arith.constant 0 : i32
    %c0_i32_1 = arith.constant 0 : i32
    return %c0_i32, %c0_i32_0 : i32, i32
  }
  func.func @transform_5(%arg0: i32) -> (i32, i32) {
    %c0_i32 = arith.constant 0 : i32
    %c0_i32_0 = arith.constant 0 : i32
    return %arg0, %c0_i32 : i32, i32
  }
}

module attributes {stable_mosaic.version = 11 : i64} {
  func.func @basecnn_kernel(%arg0: i32, %arg1: memref<2x8x256xf32, #tpu.memory_space<vmem>>, %arg2: memref<8x128xf32, #tpu.memory_space<vmem>>, %arg3: memref<1x128xf32, #tpu.memory_space<vmem>>, %arg4: memref<128x128xf32, #tpu.memory_space<vmem>>, %arg5: memref<1x128xf32, #tpu.memory_space<vmem>>, %arg6: memref<2x128xf32, #tpu.memory_space<vmem>>) attributes {dimension_semantics = [#tpu.dimension_semantics<parallel>], iteration_bounds = array<i64: 1>, scalar_prefetch = 0 : i64, scratch_operands = 0 : i64, tpu.core_type = #tpu.core_type<tc>, window_params = [{transform_indices = @transform_0, window_bounds = array<i64: 2, 8, 256>}, {pipeline_mode = #tpu.pipeline_mode<synchronous>, transform_indices = @transform_1, window_bounds = array<i64: 8, 128>}, {pipeline_mode = #tpu.pipeline_mode<synchronous>, transform_indices = @transform_2, window_bounds = array<i64: 1, 128>}, {pipeline_mode = #tpu.pipeline_mode<synchronous>, transform_indices = @transform_3, window_bounds = array<i64: 128, 128>}, {pipeline_mode = #tpu.pipeline_mode<synchronous>, transform_indices = @transform_4, window_bounds = array<i64: 1, 128>}, {transform_indices = @transform_5, window_bounds = array<i64: 2, 128>}]} {
    %c0 = arith.constant 0 : index
    %c0_0 = arith.constant 0 : index
    %c0_1 = arith.constant 0 : index
    %0 = vector.load %arg1[%c0, %c0_0, %c0_1] : memref<2x8x256xf32, #tpu.memory_space<vmem>>, vector<2x8x256xf32>
    %cst = arith.constant dense<0.000000e+00> : vector<2x8xf32>
    %1 = vector.multi_reduction <add>, %0, %cst [2] : vector<2x8x256xf32> to vector<2x8xf32>
    %c0_2 = arith.constant 0 : index
    %c0_3 = arith.constant 0 : index
    %2 = vector.load %arg2[%c0_2, %c0_3] : memref<8x128xf32, #tpu.memory_space<vmem>>, vector<8x128xf32>
    %cst_4 = arith.constant dense<0.000000e+00> : vector<2x128xf32>
    %3 = tpu.matmul %1, %2, %cst_4 {dimension_numbers = #tpu.dot_dimension_numbers<[1], [0], [0], [1], [0, 0, 1, 1], [], []>} : vector<2x8xf32>, vector<8x128xf32>, vector<2x128xf32> -> vector<2x128xf32>
    %c0_5 = arith.constant 0 : index
    %c0_6 = arith.constant 0 : index
    %4 = vector.load %arg3[%c0_5, %c0_6] : memref<1x128xf32, #tpu.memory_space<vmem>>, vector<1x128xf32>
    %5 = vector.broadcast %4 : vector<1x128xf32> to vector<2x128xf32>
    %6 = arith.addf %3, %5 : vector<2x128xf32>
    %cst_7 = arith.constant 0.000000e+00 : f32
    %7 = vector.broadcast %cst_7 : f32 to vector<2x128xf32>
    %8 = arith.cmpf oge, %6, %7 : vector<2x128xf32>
    %cst_8 = arith.constant 0.00999999977 : f32
    %9 = vector.broadcast %cst_8 : f32 to vector<2x128xf32>
    %10 = arith.mulf %9, %6 : vector<2x128xf32>
    %11 = arith.select %8, %6, %10 : vector<2x128xi1>, vector<2x128xf32>
    %c0_9 = arith.constant 0 : index
    %c0_10 = arith.constant 0 : index
    %12 = vector.load %arg4[%c0_9, %c0_10] : memref<128x128xf32, #tpu.memory_space<vmem>>, vector<128x128xf32>
    %cst_11 = arith.constant dense<0.000000e+00> : vector<2x128xf32>
    %13 = tpu.matmul %11, %12, %cst_11 {dimension_numbers = #tpu.dot_dimension_numbers<[1], [0], [0], [1], [0, 0, 1, 1], [], []>} : vector<2x128xf32>, vector<128x128xf32>, vector<2x128xf32> -> vector<2x128xf32>
    %c0_12 = arith.constant 0 : index
    %c0_13 = arith.constant 0 : index
    %14 = vector.load %arg5[%c0_12, %c0_13] : memref<1x128xf32, #tpu.memory_space<vmem>>, vector<1x128xf32>
    %15 = vector.broadcast %14 : vector<1x128xf32> to vector<2x128xf32>
    %16 = arith.addf %13, %15 : vector<2x128xf32>
    %c0_14 = arith.constant 0 : index
    %c0_15 = arith.constant 0 : index
    %17 = vector.load %arg6[%c0_14, %c0_15] : memref<2x128xf32, #tpu.memory_space<vmem>>, vector<2x128xf32>
    tpu.vector_store %arg6[%c0_14, %c0_15], %16 {strides = array<i32>} : memref<2x128xf32, #tpu.memory_space<vmem>>, vector<2x128xf32>,
    return
  }
  func.func @transform_0(%arg0: i32) -> (i32, i32, i32) {
    %c0_i32 = arith.constant 0 : i32
    %c0_i32_0 = arith.constant 0 : i32
    %c0_i32_1 = arith.constant 0 : i32
    return %arg0, %c0_i32, %c0_i32_0 : i32, i32, i32
  }
  func.func @transform_1(%arg0: i32) -> (i32, i32) {
    %c0_i32 = arith.constant 0 : i32
    %c0_i32_0 = arith.constant 0 : i32
    %c0_i32_1 = arith.constant 0 : i32
    return %c0_i32, %c0_i32_0 : i32, i32
  }
  func.func @transform_2(%arg0: i32) -> (i32, i32) {
    %c0_i32 = arith.constant 0 : i32
    %c0_i32_0 = arith.constant 0 : i32
    %c0_i32_1 = arith.constant 0 : i32
    return %c0_i32, %c0_i32_0 : i32, i32
  }
  func.func @transform_3(%arg0: i32) -> (i32, i32) {
    %c0_i32 = arith.constant 0 : i32
    %c0_i32_0 = arith.constant 0 : i32
    %c0_i32_1 = arith.constant 0 : i32
    return %c0_i32, %c0_i32_0 : i32, i32
  }
  func.func @transform_4(%arg0: i32) -> (i32, i32) {
    %c0_i32 = arith.constant 0 : i32
    %c0_i32_0 = arith.constant 0 : i32
    %c0_i32_1 = arith.constant 0 : i32
    return %c0_i32, %c0_i32_0 : i32, i32
  }
  func.func @transform_5(%arg0: i32) -> (i32, i32) {
    %c0_i32 = arith.constant 0 : i32
    %c0_i32_0 = arith.constant 0 : i32
    return %arg0, %c0_i32 : i32, i32
  }
}

</mosaic_0001>

<llo_original>
// kernel: tpu_custom_call.1
$region0: #{tpu_custom_call.1}
  #allocation0 [shape = 'u32[]', space=smem, size = 0x4, offset = 0x4, fixed_abs, tag = 'smem constant byte address 0x4 - core index']
  #allocation1 [shape = 'u32[144,128]{1,0:T(1,128)}', space=vmem, size = 0x12000, scoped, tag = 'internal scratch']
  %s0 = inlined_call_operand.hbm [shape: f32[2,8,256], index: 0, kind: input, shape index: {}]
  %s1 = inlined_call_operand.hbm [shape: f32[8,128], index: 1, kind: input, shape index: {}]
  %s2 = inlined_call_operand.vmem [shape: f32[1,128], index: 2, kind: input, shape index: {}]
  %s3 = inlined_call_operand.hbm [shape: f32[128,128], index: 3, kind: input, shape index: {}]
  %s4 = inlined_call_operand.vmem [shape: f32[1,128], index: 4, kind: input, shape index: {}]
  %s5 = inlined_call_operand.hbm [shape: f32[2,128], index: 5, kind: output, shape index: {}]
  %s6 = sld [smem:[#allocation0]]
  $region42: #{tpu_custom_call.1} parent=0
    _
  %s8 = ssub.s32 1, %s6
  %s9 = scalar_select 0, %s8, %s6
  $region1: #{tpu_custom_call.1} parent=0
    #allocation2 [shape = 'u8[16384]{0}', space=vmem, size = 0x4000, scoped, tag = 'input window, operand 0, single buffered']
    #allocation3 [shape = 's32[1]{0}', space=sflag, size = 0x4, scoped, tag = 'scoped memory for tpu_custom_call.1']
    #allocation4 [shape = 's32[1]{0}', space=sflag, size = 0x4, scoped, tag = 'scoped memory for tpu_custom_call.1']
    #allocation5 [shape = 'u8[4096]{0}', space=vmem, size = 0x1000, scoped, tag = 'input window, operand 1, single buffered']
    #allocation6 [shape = 's32[1]{0}', space=sflag, size = 0x4, scoped, tag = 'scoped memory for tpu_custom_call.1']
    #allocation7 [shape = 'u8[65536]{0}', space=vmem, size = 0x10000, scoped, tag = 'input window, operand 3, single buffered']
    #allocation8 [shape = 'u8[1024]{0}', space=vmem, size = 0x400, scoped, tag = 'output window, operand 0, single buffered']
    %10 = vsyncpa [#allocation3], 0
    %11 = vsyncpa [#allocation6], 0
    %12 = vsyncpa [#allocation4], 0
    // Predicated region
    $region2: #{tpu_custom_call.1} parent=1 // pred_check
      _
    $region3: #{tpu_custom_call.1} parent=1 // pred_check_branch
      %14 = sbr.rel (0) target = $region5
    $region4: #{tpu_custom_call.1} parent=1 // pred_region
      %s16 = ssub.s32 512, 512
      %17 = vsyncadd [#allocation3], %s16
      %s18 = sshll.u32 [#allocation2], 4
      %s19 = int_to_ptr.vmem [resolvable:$true] %s18
      %24 = dma.hbm_to_vmem [thread:$0]  %s0, 512, %s19, [#allocation3], 256, 256, 16
    $region5: #{tpu_custom_call.1} parent=1 // pred_fallthru
      _
    // Predicated region
    $region6: #{tpu_custom_call.1} parent=1 // pred_check
      _
    $region7: #{tpu_custom_call.1} parent=1 // pred_check_branch
      %26 = sbr.rel (0) target = $region9
    $region8: #{tpu_custom_call.1} parent=1 // pred_region
      %s28 = ssub.s32 128, 128
      %29 = vsyncadd [#allocation6], %s28
      %s31 = sshll.u32 [#allocation5], 4
      %s32 = int_to_ptr.vmem [resolvable:$true] %s31
      %34 = dma.hbm_to_vmem [thread:$0]  %s1, 128, %s32, [#allocation6]
    $region9: #{tpu_custom_call.1} parent=1 // pred_fallthru
      _
    // Predicated region
    $region10: #{tpu_custom_call.1} parent=1 // pred_check
      _
    $region11: #{tpu_custom_call.1} parent=1 // pred_check_branch
      %36 = sbr.rel (0) target = $region13
    $region12: #{tpu_custom_call.1} parent=1 // pred_region
      _
    $region13: #{tpu_custom_call.1} parent=1 // pred_fallthru
      _
    // Predicated region
    $region14: #{tpu_custom_call.1} parent=1 // pred_check
      _
    $region15: #{tpu_custom_call.1} parent=1 // pred_check_branch
      %38 = sbr.rel (0) target = $region17
    $region16: #{tpu_custom_call.1} parent=1 // pred_region
      %s40 = ssub.s32 2048, 2048
      %41 = vsyncadd [#allocation6], %s40
      %s42 = sshll.u32 [#allocation7], 4
      %s43 = int_to_ptr.vmem [resolvable:$true] %s42
      %48 = dma.hbm_to_vmem [thread:$0]  %s3, 2048, %s43, [#allocation6], 128, 128, 8
    $region17: #{tpu_custom_call.1} parent=1 // pred_fallthru
      _
    // Predicated region
    $region18: #{tpu_custom_call.1} parent=1 // pred_check
      _
    $region19: #{tpu_custom_call.1} parent=1 // pred_check_branch
      %50 = sbr.rel (0) target = $region21
    $region20: #{tpu_custom_call.1} parent=1 // pred_region
      _
    $region21: #{tpu_custom_call.1} parent=1 // pred_fallthru
      _
    // Predicated region
    $region22: #{tpu_custom_call.1} parent=1 // pred_check
      _
    $region23: #{tpu_custom_call.1} parent=1 // pred_check_branch
      %52 = sbr.rel (0) target = $region25
    $region24: #{tpu_custom_call.1} parent=1 // pred_region
      %53 = dma.done [#allocation3], 512
    $region25: #{tpu_custom_call.1} parent=1 // pred_fallthru
      _
    // Predicated region
    $region26: #{tpu_custom_call.1} parent=1 // pred_check
      _
    $region27: #{tpu_custom_call.1} parent=1 // pred_check_branch
      %55 = sbr.rel (0) target = $region29
    $region28: #{tpu_custom_call.1} parent=1 // pred_region
      %56 = dma.done [#allocation6], 128
    $region29: #{tpu_custom_call.1} parent=1 // pred_fallthru
      _
    // Predicated region
    $region30: #{tpu_custom_call.1} parent=1 // pred_check
      _
    $region31: #{tpu_custom_call.1} parent=1 // pred_check_branch
      %58 = sbr.rel (0) target = $region33
    $region32: #{tpu_custom_call.1} parent=1 // pred_region
      %59 = dma.done [#allocation6], 2048
    $region33: #{tpu_custom_call.1} parent=1 // pred_fallthru
      _
    %v60 = vld [vmem:[#allocation2] sm:$0xff]
    %v61 = vld [vmem:[#allocation2 + $0x8] sm:$0xff]
    %v62 = vld [vmem:[#allocation2 + $0x10] sm:$0xff]
    %v63 = vld [vmem:[#allocation2 + $0x18] sm:$0xff]
    %v64 = vadd.f32 %v60, %v61
    %65 = vadd.xlane.f32.xlu0 %v64
    %v66 = vpop.xlane.xlu0 %65
    %v67 = vadd.f32 %v62, %v63
    %68 = vadd.xlane.f32.xlu0 %v67
    %v69 = vpop.xlane.xlu0 %68
    %v70 = vld [vmem:[#allocation5] sm:$0xff]
    %v71 = vld [vmem:[%s2] sm:$0x1]
    %v73 = vlaneseq
    %v74 = vshrl.u32 %v73, 7
    %v75 = vsub.s32 0, %v74
    %v76 = vrot.slane %v71, %v75
    %v80 = vlaneseq
    %v81 = vand.u32 %v80, 127
    %v82 = vlaneseq
    %v83 = vshrl.u32 %v82, 7
    %v84 = vsub.s32 %v81, %v83
    %v85 = vrot.slane %v66, %v84
    %v86 = vlaneseq
    %v87 = vshrl.u32 %v86, 7
    %v88 = vsub.s32 %v81, %v87
    %v89 = vrot.slane %v69, %v88
    %vm90 = vcmask 1041409
    %v91 = vsel %vm90, %v89, %v85
    %vm92 = vcmask 64512
    %v93 = vsel %vm92, %v91, 0
    %95 = vmatprep.subr.mxu0 0.0
    %96 = vmatpush1.msra.mxu0 %v70
    %97 = vmatprep.subr.mxu0 0.0
    %98 = vmatpush1.msra.mxu0 0.0
    %99 = vmatprep.subr.mxu0 0.0
    %100 = vmatpush1.msra.mxu0 0.0
    %101 = vmatprep.subr.mxu0 0.0
    %102 = vmatpush1.msra.mxu0 0.0
    %103 = vmatprep.subr.mxu0 0.0
    %104 = vmatpush1.msra.mxu0 0.0
    %105 = vmatprep.subr.mxu0 0.0
    %106 = vmatpush1.msra.mxu0 0.0
    %107 = vmatprep.subr.mxu0 0.0
    %108 = vmatpush1.msra.mxu0 0.0
    %109 = vmatprep.subr.mxu0 0.0
    %110 = vmatpush1.msra.mxu0 0.0
    %111 = vmatprep.subr.mxu0 0.0
    %112 = vmatpush1.msra.mxu0 0.0
    %113 = vmatprep.subr.mxu0 0.0
    %114 = vmatpush1.msra.mxu0 0.0
    %115 = vmatprep.subr.mxu0 0.0
    %116 = vmatpush1.msra.mxu0 0.0
    %117 = vmatprep.subr.mxu0 0.0
    %118 = vmatpush1.msra.mxu0 0.0
    %119 = vmatprep.subr.mxu0 0.0
    %120 = vmatpush1.msra.mxu0 0.0
    %121 = vmatprep.subr.mxu0 0.0
    %122 = vmatpush1.msra.mxu0 0.0
    %123 = vmatprep.subr.mxu0 0.0
    %124 = vmatpush1.msra.mxu0 0.0
    %125 = vmatprep.subr.mxu0 0.0
    %126 = vmatpush1.msra.mxu0 0.0
    %127 = vmatprep.subr.mxu0 0.0
    %128 = vmatpush1.msra.mxu0 0.0
    %129 = vmatprep.subr.mxu0 0.0
    %130 = vmatpush1.msra.mxu0 0.0
    %131 = vmatprep.subr.mxu0 0.0
    %132 = vmatpush1.msra.mxu0 0.0
    %133 = vmatprep.subr.mxu0 0.0
    %134 = vmatpush1.msra.mxu0 0.0
    %135 = vmatprep.subr.mxu0 0.0
    %136 = vmatpush1.msra.mxu0 0.0
    %137 = vmatprep.subr.mxu0 0.0
    %138 = vmatpush1.msra.mxu0 0.0
    %139 = vmatprep.subr.mxu0 0.0
    %140 = vmatpush1.msra.mxu0 0.0
    %141 = vmatprep.subr.mxu0 0.0
    %142 = vmatpush1.msra.mxu0 0.0
    %143 = vmatprep.subr.mxu0 0.0
    %144 = vmatpush1.msra.mxu0 0.0
    %145 = vmatprep.subr.mxu0 0.0
    %146 = vmatpush1.msra.mxu0 0.0
    %147 = vmatprep.subr.mxu0 0.0
    %148 = vmatpush1.msra.mxu0 0.0
    %149 = vmatprep.subr.mxu0 0.0
    %150 = vmatpush1.msra.mxu0 0.0
    %151 = vmatprep.subr.mxu0 0.0
    %152 = vmatpush1.msra.mxu0 0.0
    %153 = vmatprep.subr.mxu0 0.0
    %154 = vmatpush1.msra.mxu0 0.0
    %155 = vmatprep.subr.mxu0 0.0
    %156 = vmatpush1.msra.mxu0 0.0
    %157 = vmatprep.subr.mxu0 0.0
    %158 = vmatpush1.msra.mxu0 0.0
    %159 = vmatprep.mubr.f32.mxu0 0.0
    %160 = vmatmul.mubr.f32.gmra.mrb[0].mxu0 %v93
    %v161 = vpop.f32.mrb[0].mxu0
    %v162 = vadd.f32 %v76, %v161
    %v163 = vpop.f32.mrb[0].mxu0
    %164 = vdwg.mxu0
    %vm165 = vcmp.ge.f32.partialorder %v162, 0.0
    %v166 = vmul.f32 %v162, 0.01
    %v167 = vsel %vm165, %v162, %v166
    %v168 = vld [vmem:[#allocation7] sm:$0xff]
    %v169 = vld [vmem:[#allocation7 + $0x8] sm:$0xff]
    %v170 = vld [vmem:[#allocation7 + $0x10] sm:$0xff]
    %v171 = vld [vmem:[#allocation7 + $0x18] sm:$0xff]
    %v172 = vld [vmem:[#allocation7 + $0x20] sm:$0xff]
    %v173 = vld [vmem:[#allocation7 + $0x28] sm:$0xff]
    %v174 = vld [vmem:[#allocation7 + $0x30] sm:$0xff]
    %v175 = vld [vmem:[#allocation7 + $0x38] sm:$0xff]
    %v176 = vld [vmem:[#allocation7 + $0x40] sm:$0xff]
    %v177 = vld [vmem:[#allocation7 + $0x48] sm:$0xff]
    %v178 = vld [vmem:[#allocation7 + $0x50] sm:$0xff]
    %v179 = vld [vmem:[#allocation7 + $0x58] sm:$0xff]
    %v180 = vld [vmem:[#allocation7 + $0x60] sm:$0xff]
    %v181 = vld [vmem:[#allocation7 + $0x68] sm:$0xff]
    %v182 = vld [vmem:[#allocation7 + $0x70] sm:$0xff]
    %v183 = vld [vmem:[#allocation7 + $0x78] sm:$0xff]
    %v184 = vld [vmem:[%s4] sm:$0x1]
    %v186 = vlaneseq
    %v187 = vshrl.u32 %v186, 7
    %v188 = vsub.s32 0, %v187
    %v189 = vrot.slane %v184, %v188
    %191 = vmatprep.subr.mxu0 0.0
    %192 = vmatpush1.msra.mxu0 %v168
    %193 = vmatprep.subr.mxu0 0.0
    %194 = vmatpush1.msra.mxu0 %v169
    %195 = vmatprep.subr.mxu0 0.0
    %196 = vmatpush1.msra.mxu0 %v170
    %197 = vmatprep.subr.mxu0 0.0
    %198 = vmatpush1.msra.mxu0 %v171
    %199 = vmatprep.subr.mxu0 0.0
    %200 = vmatpush1.msra.mxu0 %v172
    %201 = vmatprep.subr.mxu0 0.0
    %202 = vmatpush1.msra.mxu0 %v173
    %203 = vmatprep.subr.mxu0 0.0
    %204 = vmatpush1.msra.mxu0 %v174
    %205 = vmatprep.subr.mxu0 0.0
    %206 = vmatpush1.msra.mxu0 %v175
    %207 = vmatprep.subr.mxu0 0.0
    %208 = vmatpush1.msra.mxu0 %v176
    %209 = vmatprep.subr.mxu0 0.0
    %210 = vmatpush1.msra.mxu0 %v177
    %211 = vmatprep.subr.mxu0 0.0
    %212 = vmatpush1.msra.mxu0 %v178
    %213 = vmatprep.subr.mxu0 0.0
    %214 = vmatpush1.msra.mxu0 %v179
    %215 = vmatprep.subr.mxu0 0.0
    %216 = vmatpush1.msra.mxu0 %v180
    %217 = vmatprep.subr.mxu0 0.0
    %218 = vmatpush1.msra.mxu0 %v181
    %219 = vmatprep.subr.mxu0 0.0
    %220 = vmatpush1.msra.mxu0 %v182
    %221 = vmatprep.subr.mxu0 0.0
    %222 = vmatpush1.msra.mxu0 %v183
    %223 = vmatprep.subr.mxu0 0.0
    %224 = vmatpush1.msra.mxu0 0.0
    %225 = vmatprep.subr.mxu0 0.0
    %226 = vmatpush1.msra.mxu0 0.0
    %227 = vmatprep.subr.mxu0 0.0
    %228 = vmatpush1.msra.mxu0 0.0
    %229 = vmatprep.subr.mxu0 0.0
    %230 = vmatpush1.msra.mxu0 0.0
    %231 = vmatprep.subr.mxu0 0.0
    %232 = vmatpush1.msra.mxu0 0.0
    %233 = vmatprep.subr.mxu0 0.0
    %234 = vmatpush1.msra.mxu0 0.0
    %235 = vmatprep.subr.mxu0 0.0
    %236 = vmatpush1.msra.mxu0 0.0
    %237 = vmatprep.subr.mxu0 0.0
    %238 = vmatpush1.msra.mxu0 0.0
    %239 = vmatprep.subr.mxu0 0.0
    %240 = vmatpush1.msra.mxu0 0.0
    %241 = vmatprep.subr.mxu0 0.0
    %242 = vmatpush1.msra.mxu0 0.0
    %243 = vmatprep.subr.mxu0 0.0
    %244 = vmatpush1.msra.mxu0 0.0
    %245 = vmatprep.subr.mxu0 0.0
    %246 = vmatpush1.msra.mxu0 0.0
    %247 = vmatprep.subr.mxu0 0.0
    %248 = vmatpush1.msra.mxu0 0.0
    %249 = vmatprep.subr.mxu0 0.0
    %250 = vmatpush1.msra.mxu0 0.0
    %251 = vmatprep.subr.mxu0 0.0
    %252 = vmatpush1.msra.mxu0 0.0
    %253 = vmatprep.subr.mxu0 0.0
    %254 = vmatpush1.msra.mxu0 0.0
    %255 = vmatprep.mubr.f32.mxu0 0.0
    %256 = vmatmul.mubr.f32.gmra.mrb[0].mxu0 %v167
    %v257 = vpop.f32.mrb[0].mxu0
    %v258 = vadd.f32 %v189, %v257
    %v259 = vpop.f32.mrb[0].mxu0
    %260 = vdwg.mxu0
    %261 = vst [vmem:[#allocation8] sm:$0x3] %v258
    // Predicated region
    $region34: #{tpu_custom_call.1} parent=1 // pred_check
      _
    $region35: #{tpu_custom_call.1} parent=1 // pred_check_branch
      %263 = sbr.rel (0) target = $region37
    $region36: #{tpu_custom_call.1} parent=1 // pred_region
      %s265 = ssub.s32 32, 32
      %266 = vsyncadd [#allocation4], %s265
      %s268 = sshll.u32 [#allocation8], 4
      %s269 = int_to_ptr.vmem [resolvable:$true] %s268
      %271 = dma.vmem_to_hbm [thread:$0]  %s269, 32, %s5, [#allocation4]
    $region37: #{tpu_custom_call.1} parent=1 // pred_fallthru
      _
    // Predicated region
    $region38: #{tpu_custom_call.1} parent=1 // pred_check
      _
    $region39: #{tpu_custom_call.1} parent=1 // pred_check_branch
      %273 = sbr.rel (0) target = $region41
    $region40: #{tpu_custom_call.1} parent=1 // pred_region
      %274 = dma.done [#allocation4], 32
    $region41: #{tpu_custom_call.1} parent=1 // pred_fallthru
      _
    %275 = vsyncpa [#allocation3], 1
    %276 = vsyncpa [#allocation6], 1
    %277 = vsyncpa [#allocation4], 1

// kernel: tpu_custom_call.1
$region0: #{tpu_custom_call.1}
  #allocation0 [shape = 'u32[]', space=smem, size = 0x4, offset = 0x4, fixed_abs, tag = 'smem constant byte address 0x4 - core index']
  #allocation1 [shape = 'u32[144,128]{1,0:T(1,128)}', space=vmem, size = 0x12000, scoped, tag = 'internal scratch']
  %s0 = inlined_call_operand.hbm [shape: f32[2,8,256], index: 0, kind: input, shape index: {}]
  %s1 = inlined_call_operand.hbm [shape: f32[8,128], index: 1, kind: input, shape index: {}]
  %s2 = inlined_call_operand.vmem [shape: f32[1,128], index: 2, kind: input, shape index: {}]
  %s3 = inlined_call_operand.hbm [shape: f32[128,128], index: 3, kind: input, shape index: {}]
  %s4 = inlined_call_operand.vmem [shape: f32[1,128], index: 4, kind: input, shape index: {}]
  %s5 = inlined_call_operand.hbm [shape: f32[2,128], index: 5, kind: output, shape index: {}]
  %s6 = sld [smem:[#allocation0]]
  $region42: #{tpu_custom_call.1} parent=0
    _
  %s8 = ssub.s32 1, %s6
  %s9 = scalar_select 0, %s8, %s6
  $region1: #{tpu_custom_call.1} parent=0
    #allocation2 [shape = 'u8[16384]{0}', space=vmem, size = 0x4000, scoped, tag = 'input window, operand 0, single buffered']
    #allocation3 [shape = 's32[1]{0}', space=sflag, size = 0x4, scoped, tag = 'scoped memory for tpu_custom_call.1']
    #allocation4 [shape = 's32[1]{0}', space=sflag, size = 0x4, scoped, tag = 'scoped memory for tpu_custom_call.1']
    #allocation5 [shape = 'u8[4096]{0}', space=vmem, size = 0x1000, scoped, tag = 'input window, operand 1, single buffered']
    #allocation6 [shape = 's32[1]{0}', space=sflag, size = 0x4, scoped, tag = 'scoped memory for tpu_custom_call.1']
    #allocation7 [shape = 'u8[65536]{0}', space=vmem, size = 0x10000, scoped, tag = 'input window, operand 3, single buffered']
    #allocation8 [shape = 'u8[1024]{0}', space=vmem, size = 0x400, scoped, tag = 'output window, operand 0, single buffered']
    %10 = vsyncpa [#allocation3], 0
    %11 = vsyncpa [#allocation6], 0
    %12 = vsyncpa [#allocation4], 0
    // Predicated region
    $region2: #{tpu_custom_call.1} parent=1 // pred_check
      _
    $region3: #{tpu_custom_call.1} parent=1 // pred_check_branch
      %14 = sbr.rel (0) target = $region5
    $region4: #{tpu_custom_call.1} parent=1 // pred_region
      %s16 = ssub.s32 512, 512
      %17 = vsyncadd [#allocation3], %s16
      %s18 = sshll.u32 [#allocation2], 4
      %s19 = int_to_ptr.vmem [resolvable:$true] %s18
      %24 = dma.hbm_to_vmem [thread:$0]  %s0, 512, %s19, [#allocation3], 256, 256, 16
    $region5: #{tpu_custom_call.1} parent=1 // pred_fallthru
      _
    // Predicated region
    $region6: #{tpu_custom_call.1} parent=1 // pred_check
      _
    $region7: #{tpu_custom_call.1} parent=1 // pred_check_branch
      %26 = sbr.rel (0) target = $region9
    $region8: #{tpu_custom_call.1} parent=1 // pred_region
      %s28 = ssub.s32 128, 128
      %29 = vsyncadd [#allocation6], %s28
      %s31 = sshll.u32 [#allocation5], 4
      %s32 = int_to_ptr.vmem [resolvable:$true] %s31
      %34 = dma.hbm_to_vmem [thread:$0]  %s1, 128, %s32, [#allocation6]
    $region9: #{tpu_custom_call.1} parent=1 // pred_fallthru
      _
    // Predicated region
    $region10: #{tpu_custom_call.1} parent=1 // pred_check
      _
    $region11: #{tpu_custom_call.1} parent=1 // pred_check_branch
      %36 = sbr.rel (0) target = $region13
    $region12: #{tpu_custom_call.1} parent=1 // pred_region
      _
    $region13: #{tpu_custom_call.1} parent=1 // pred_fallthru
      _
    // Predicated region
    $region14: #{tpu_custom_call.1} parent=1 // pred_check
      _
    $region15: #{tpu_custom_call.1} parent=1 // pred_check_branch
      %38 = sbr.rel (0) target = $region17
    $region16: #{tpu_custom_call.1} parent=1 // pred_region
      %s40 = ssub.s32 2048, 2048
      %41 = vsyncadd [#allocation6], %s40
      %s42 = sshll.u32 [#allocation7], 4
      %s43 = int_to_ptr.vmem [resolvable:$true] %s42
      %48 = dma.hbm_to_vmem [thread:$0]  %s3, 2048, %s43, [#allocation6], 128, 128, 8
    $region17: #{tpu_custom_call.1} parent=1 // pred_fallthru
      _
    // Predicated region
    $region18: #{tpu_custom_call.1} parent=1 // pred_check
      _
    $region19: #{tpu_custom_call.1} parent=1 // pred_check_branch
      %50 = sbr.rel (0) target = $region21
    $region20: #{tpu_custom_call.1} parent=1 // pred_region
      _
    $region21: #{tpu_custom_call.1} parent=1 // pred_fallthru
      _
    // Predicated region
    $region22: #{tpu_custom_call.1} parent=1 // pred_check
      _
    $region23: #{tpu_custom_call.1} parent=1 // pred_check_branch
      %52 = sbr.rel (0) target = $region25
    $region24: #{tpu_custom_call.1} parent=1 // pred_region
      %53 = dma.done [#allocation3], 512
    $region25: #{tpu_custom_call.1} parent=1 // pred_fallthru
      _
    // Predicated region
    $region26: #{tpu_custom_call.1} parent=1 // pred_check
      _
    $region27: #{tpu_custom_call.1} parent=1 // pred_check_branch
      %55 = sbr.rel (0) target = $region29
    $region28: #{tpu_custom_call.1} parent=1 // pred_region
      %56 = dma.done [#allocation6], 128
    $region29: #{tpu_custom_call.1} parent=1 // pred_fallthru
      _
    // Predicated region
    $region30: #{tpu_custom_call.1} parent=1 // pred_check
      _
    $region31: #{tpu_custom_call.1} parent=1 // pred_check_branch
      %58 = sbr.rel (0) target = $region33
    $region32: #{tpu_custom_call.1} parent=1 // pred_region
      %59 = dma.done [#allocation6], 2048
    $region33: #{tpu_custom_call.1} parent=1 // pred_fallthru
      _
    %v60 = vld [vmem:[#allocation2] sm:$0xff]
    %v61 = vld [vmem:[#allocation2 + $0x8] sm:$0xff]
    %v62 = vld [vmem:[#allocation2 + $0x10] sm:$0xff]
    %v63 = vld [vmem:[#allocation2 + $0x18] sm:$0xff]
    %v64 = vadd.f32 %v60, %v61
    %65 = vadd.xlane.f32.xlu0 %v64
    %v66 = vpop.xlane.xlu0 %65
    %v67 = vadd.f32 %v62, %v63
    %68 = vadd.xlane.f32.xlu0 %v67
    %v69 = vpop.xlane.xlu0 %68
    %v70 = vld [vmem:[#allocation5] sm:$0xff]
    %v71 = vld [vmem:[%s2] sm:$0x1]
    %v73 = vlaneseq
    %v74 = vshrl.u32 %v73, 7
    %v75 = vsub.s32 0, %v74
    %v76 = vrot.slane %v71, %v75
    %v80 = vlaneseq
    %v81 = vand.u32 %v80, 127
    %v82 = vlaneseq
    %v83 = vshrl.u32 %v82, 7
    %v84 = vsub.s32 %v81, %v83
    %v85 = vrot.slane %v66, %v84
    %v86 = vlaneseq
    %v87 = vshrl.u32 %v86, 7
    %v88 = vsub.s32 %v81, %v87
    %v89 = vrot.slane %v69, %v88
    %vm90 = vcmask 1041409
    %v91 = vsel %vm90, %v89, %v85
    %vm92 = vcmask 64512
    %v93 = vsel %vm92, %v91, 0
    %95 = vmatprep.subr.mxu0 0.0
    %96 = vmatpush1.msra.mxu0 %v70
    %97 = vmatprep.subr.mxu0 0.0
    %98 = vmatpush1.msra.mxu0 0.0
    %99 = vmatprep.subr.mxu0 0.0
    %100 = vmatpush1.msra.mxu0 0.0
    %101 = vmatprep.subr.mxu0 0.0
    %102 = vmatpush1.msra.mxu0 0.0
    %103 = vmatprep.subr.mxu0 0.0
    %104 = vmatpush1.msra.mxu0 0.0
    %105 = vmatprep.subr.mxu0 0.0
    %106 = vmatpush1.msra.mxu0 0.0
    %107 = vmatprep.subr.mxu0 0.0
    %108 = vmatpush1.msra.mxu0 0.0
    %109 = vmatprep.subr.mxu0 0.0
    %110 = vmatpush1.msra.mxu0 0.0
    %111 = vmatprep.subr.mxu0 0.0
    %112 = vmatpush1.msra.mxu0 0.0
    %113 = vmatprep.subr.mxu0 0.0
    %114 = vmatpush1.msra.mxu0 0.0
    %115 = vmatprep.subr.mxu0 0.0
    %116 = vmatpush1.msra.mxu0 0.0
    %117 = vmatprep.subr.mxu0 0.0
    %118 = vmatpush1.msra.mxu0 0.0
    %119 = vmatprep.subr.mxu0 0.0
    %120 = vmatpush1.msra.mxu0 0.0
    %121 = vmatprep.subr.mxu0 0.0
    %122 = vmatpush1.msra.mxu0 0.0
    %123 = vmatprep.subr.mxu0 0.0
    %124 = vmatpush1.msra.mxu0 0.0
    %125 = vmatprep.subr.mxu0 0.0
    %126 = vmatpush1.msra.mxu0 0.0
    %127 = vmatprep.subr.mxu0 0.0
    %128 = vmatpush1.msra.mxu0 0.0
    %129 = vmatprep.subr.mxu0 0.0
    %130 = vmatpush1.msra.mxu0 0.0
    %131 = vmatprep.subr.mxu0 0.0
    %132 = vmatpush1.msra.mxu0 0.0
    %133 = vmatprep.subr.mxu0 0.0
    %134 = vmatpush1.msra.mxu0 0.0
    %135 = vmatprep.subr.mxu0 0.0
    %136 = vmatpush1.msra.mxu0 0.0
    %137 = vmatprep.subr.mxu0 0.0
    %138 = vmatpush1.msra.mxu0 0.0
    %139 = vmatprep.subr.mxu0 0.0
    %140 = vmatpush1.msra.mxu0 0.0
    %141 = vmatprep.subr.mxu0 0.0
    %142 = vmatpush1.msra.mxu0 0.0
    %143 = vmatprep.subr.mxu0 0.0
    %144 = vmatpush1.msra.mxu0 0.0
    %145 = vmatprep.subr.mxu0 0.0
    %146 = vmatpush1.msra.mxu0 0.0
    %147 = vmatprep.subr.mxu0 0.0
    %148 = vmatpush1.msra.mxu0 0.0
    %149 = vmatprep.subr.mxu0 0.0
    %150 = vmatpush1.msra.mxu0 0.0
    %151 = vmatprep.subr.mxu0 0.0
    %152 = vmatpush1.msra.mxu0 0.0
    %153 = vmatprep.subr.mxu0 0.0
    %154 = vmatpush1.msra.mxu0 0.0
    %155 = vmatprep.subr.mxu0 0.0
    %156 = vmatpush1.msra.mxu0 0.0
    %157 = vmatprep.subr.mxu0 0.0
    %158 = vmatpush1.msra.mxu0 0.0
    %159 = vmatprep.mubr.f32.mxu0 0.0
    %160 = vmatmul.mubr.f32.gmra.mrb[0].mxu0 %v93
    %v161 = vpop.f32.mrb[0].mxu0
    %v162 = vadd.f32 %v76, %v161
    %v163 = vpop.f32.mrb[0].mxu0
    %164 = vdwg.mxu0
    %vm165 = vcmp.ge.f32.partialorder %v162, 0.0
    %v166 = vmul.f32 %v162, 0.01
    %v167 = vsel %vm165, %v162, %v166
    %v168 = vld [vmem:[#allocation7] sm:$0xff]
    %v169 = vld [vmem:[#allocation7 + $0x8] sm:$0xff]
    %v170 = vld [vmem:[#allocation7 + $0x10] sm:$0xff]
    %v171 = vld [vmem:[#allocation7 + $0x18] sm:$0xff]
    %v172 = vld [vmem:[#allocation7 + $0x20] sm:$0xff]
    %v173 = vld [vmem:[#allocation7 + $0x28] sm:$0xff]
    %v174 = vld [vmem:[#allocation7 + $0x30] sm:$0xff]
    %v175 = vld [vmem:[#allocation7 + $0x38] sm:$0xff]
    %v176 = vld [vmem:[#allocation7 + $0x40] sm:$0xff]
    %v177 = vld [vmem:[#allocation7 + $0x48] sm:$0xff]
    %v178 = vld [vmem:[#allocation7 + $0x50] sm:$0xff]
    %v179 = vld [vmem:[#allocation7 + $0x58] sm:$0xff]
    %v180 = vld [vmem:[#allocation7 + $0x60] sm:$0xff]
    %v181 = vld [vmem:[#allocation7 + $0x68] sm:$0xff]
    %v182 = vld [vmem:[#allocation7 + $0x70] sm:$0xff]
    %v183 = vld [vmem:[#allocation7 + $0x78] sm:$0xff]
    %v184 = vld [vmem:[%s4] sm:$0x1]
    %v186 = vlaneseq
    %v187 = vshrl.u32 %v186, 7
    %v188 = vsub.s32 0, %v187
    %v189 = vrot.slane %v184, %v188
    %191 = vmatprep.subr.mxu0 0.0
    %192 = vmatpush1.msra.mxu0 %v168
    %193 = vmatprep.subr.mxu0 0.0
    %194 = vmatpush1.msra.mxu0 %v169
    %195 = vmatprep.subr.mxu0 0.0
    %196 = vmatpush1.msra.mxu0 %v170
    %197 = vmatprep.subr.mxu0 0.0
    %198 = vmatpush1.msra.mxu0 %v171
    %199 = vmatprep.subr.mxu0 0.0
    %200 = vmatpush1.msra.mxu0 %v172
    %201 = vmatprep.subr.mxu0 0.0
    %202 = vmatpush1.msra.mxu0 %v173
    %203 = vmatprep.subr.mxu0 0.0
    %204 = vmatpush1.msra.mxu0 %v174
    %205 = vmatprep.subr.mxu0 0.0
    %206 = vmatpush1.msra.mxu0 %v175
    %207 = vmatprep.subr.mxu0 0.0
    %208 = vmatpush1.msra.mxu0 %v176
    %209 = vmatprep.subr.mxu0 0.0
    %210 = vmatpush1.msra.mxu0 %v177
    %211 = vmatprep.subr.mxu0 0.0
    %212 = vmatpush1.msra.mxu0 %v178
    %213 = vmatprep.subr.mxu0 0.0
    %214 = vmatpush1.msra.mxu0 %v179
    %215 = vmatprep.subr.mxu0 0.0
    %216 = vmatpush1.msra.mxu0 %v180
    %217 = vmatprep.subr.mxu0 0.0
    %218 = vmatpush1.msra.mxu0 %v181
    %219 = vmatprep.subr.mxu0 0.0
    %220 = vmatpush1.msra.mxu0 %v182
    %221 = vmatprep.subr.mxu0 0.0
    %222 = vmatpush1.msra.mxu0 %v183
    %223 = vmatprep.subr.mxu0 0.0
    %224 = vmatpush1.msra.mxu0 0.0
    %225 = vmatprep.subr.mxu0 0.0
    %226 = vmatpush1.msra.mxu0 0.0
    %227 = vmatprep.subr.mxu0 0.0
    %228 = vmatpush1.msra.mxu0 0.0
    %229 = vmatprep.subr.mxu0 0.0
    %230 = vmatpush1.msra.mxu0 0.0
    %231 = vmatprep.subr.mxu0 0.0
    %232 = vmatpush1.msra.mxu0 0.0
    %233 = vmatprep.subr.mxu0 0.0
    %234 = vmatpush1.msra.mxu0 0.0
    %235 = vmatprep.subr.mxu0 0.0
    %236 = vmatpush1.msra.mxu0 0.0
    %237 = vmatprep.subr.mxu0 0.0
    %238 = vmatpush1.msra.mxu0 0.0
    %239 = vmatprep.subr.mxu0 0.0
    %240 = vmatpush1.msra.mxu0 0.0
    %241 = vmatprep.subr.mxu0 0.0
    %242 = vmatpush1.msra.mxu0 0.0
    %243 = vmatprep.subr.mxu0 0.0
    %244 = vmatpush1.msra.mxu0 0.0
    %245 = vmatprep.subr.mxu0 0.0
    %246 = vmatpush1.msra.mxu0 0.0
    %247 = vmatprep.subr.mxu0 0.0
    %248 = vmatpush1.msra.mxu0 0.0
    %249 = vmatprep.subr.mxu0 0.0
    %250 = vmatpush1.msra.mxu0 0.0
    %251 = vmatprep.subr.mxu0 0.0
    %252 = vmatpush1.msra.mxu0 0.0
    %253 = vmatprep.subr.mxu0 0.0
    %254 = vmatpush1.msra.mxu0 0.0
    %255 = vmatprep.mubr.f32.mxu0 0.0
    %256 = vmatmul.mubr.f32.gmra.mrb[0].mxu0 %v167
    %v257 = vpop.f32.mrb[0].mxu0
    %v258 = vadd.f32 %v189, %v257
    %v259 = vpop.f32.mrb[0].mxu0
    %260 = vdwg.mxu0
    %261 = vst [vmem:[#allocation8] sm:$0x3] %v258
    // Predicated region
    $region34: #{tpu_custom_call.1} parent=1 // pred_check
      _
    $region35: #{tpu_custom_call.1} parent=1 // pred_check_branch
      %263 = sbr.rel (0) target = $region37
    $region36: #{tpu_custom_call.1} parent=1 // pred_region
      %s265 = ssub.s32 32, 32
      %266 = vsyncadd [#allocation4], %s265
      %s268 = sshll.u32 [#allocation8], 4
      %s269 = int_to_ptr.vmem [resolvable:$true] %s268
      %271 = dma.vmem_to_hbm [thread:$0]  %s269, 32, %s5, [#allocation4]
    $region37: #{tpu_custom_call.1} parent=1 // pred_fallthru
      _
    // Predicated region
    $region38: #{tpu_custom_call.1} parent=1 // pred_check
      _
    $region39: #{tpu_custom_call.1} parent=1 // pred_check_branch
      %273 = sbr.rel (0) target = $region41
    $region40: #{tpu_custom_call.1} parent=1 // pred_region
      %274 = dma.done [#allocation4], 32
    $region41: #{tpu_custom_call.1} parent=1 // pred_fallthru
      _
    %275 = vsyncpa [#allocation3], 1
    %276 = vsyncpa [#allocation6], 1
    %277 = vsyncpa [#allocation4], 1

</llo_original>
